<compile_context>
chip_gen: v5e
topology: v5e:2x2
jax: 0.10.0
libtpu: 0.0.40
codegen_flags: <defaults>
</compile_context>

<pallas_src>
import functools

import jax
import jax.numpy as jnp
from jax.experimental import pallas as pl
from jax.experimental.pallas import tpu as pltpu


def _round_up(x, m):
    return -(-x // m) * m


def _trunk_head_kernel(patches_ref, w_embed_ref, w_proj_ref, b_out_ref,
                       out_ref, acc_ref, *, tb, pc):
    # patches_ref: (TB, Pc, D)   one patch-chunk for TB images (compute dtype)
    # w_embed_ref: (D, Fp)       patch-embed weight, F zero-padded to 128-mult
    # w_proj_ref : (Fp, Ep)      head weight with the 1/P pool scale folded in
    # b_out_ref  : (1, Ep)       conv bias pre-projected through the head (f32)
    # out_ref    : (TB, Ep)      image features (f32), written on last chunk
    # acc_ref    : (TB, Fp)      f32 accumulator for the pooled patch-embed sum
    c = pl.program_id(1)

    @pl.when(c == 0)
    def _():
        acc_ref[...] = jnp.zeros_like(acc_ref)

    d = patches_ref.shape[-1]
    fp = w_embed_ref.shape[-1]

    # trunk: patch-embed conv for this chunk as one MXU matmul (bias deferred
    # past the pool; zero-padded patches contribute zero).
    chunk = patches_ref[...].reshape(tb * pc, d)
    emb = jnp.dot(chunk, w_embed_ref[...],
                  preferred_element_type=jnp.float32)            # [TB*Pc, Fp] f32

    # trunk global_pool='avg', streamed: accumulate the per-image patch sum
    # (the 1/P scale is folded into w_proj_ref on the glue side).
    acc_ref[...] += emb.reshape(tb, pc, fp).sum(axis=1)          # [TB, Fp] f32

    @pl.when(c == pl.num_programs(1) - 1)
    def _():
        # head: Dropout(p=0.0) is identity in eval; Linear(F -> E, bias=False).
        pooled = acc_ref[...].astype(w_proj_ref.dtype)
        proj = jnp.dot(pooled, w_proj_ref[...],
                       preferred_element_type=jnp.float32)       # [TB, Ep] f32
        out_ref[...] = (proj + b_out_ref[...]).astype(out_ref.dtype)


def timm_model_forward(x_nchw, w_conv, b_conv, w_proj, *, patch,
                       block_b=None, compute_dtype=jnp.bfloat16):
    """x_nchw: [B, C, H, W]; returns image features [B, embed_dim] (f32)."""
    B, C, H, W = x_nchw.shape
    F_out, C_w, ph, pw = w_conv.shape
    assert C_w == C and ph == patch and pw == patch
    E = w_proj.shape[0]                       # torch Linear weight is [out, in]
    Hp, Wp = H // patch, W // patch
    P = Hp * Wp
    D = C * patch * patch
    itemsize = jnp.dtype(compute_dtype).itemsize

    F_pad = _round_up(F_out, 128)
    E_pad = _round_up(E, 128)
    P8 = _round_up(P, 8)

    # --- generation-aware scoped-VMEM budget -------------------------------
    try:
        info = pltpu.get_tpu_info()
        phys_vmem = int(getattr(info, "vmem_capacity_bytes", 0) or 0)
    except Exception:  # pragma: no cover - conservative fallback off-TPU
        phys_vmem = 0
    if phys_vmem <= 0:
        phys_vmem = 64 << 20
    vmem_budget = (96 << 20) if phys_vmem >= (128 << 20) else (32 << 20)
    usable = (vmem_budget * 4) // 5            # 80% of budget for our blocks

    d_lane = _round_up(D, 128)
    d_sub = _round_up(D, 8)

    def footprint(tb, pc):
        return (2 * tb * pc * d_lane * itemsize          # patch chunk, dbl-buffered
                + tb * pc * d_lane * itemsize            # in-kernel 2D reshape copy
                + tb * pc * F_pad * 4                    # f32 emb chunk
                + 2 * (d_sub * F_pad + F_pad * E_pad) * itemsize  # weights x2 bufs
                + 2 * 8 * E_pad * 4                      # b_out (f32)
                + 2 * tb * E_pad * 4                     # output block (f32)
                + tb * F_pad * 4)                        # accumulator scratch

    # --- choose images-per-block TB -----------------------------------------
    if block_b is None:
        TB = max(8, _round_up(pl.cdiv(256, max(P, 1)), 8))
    else:
        TB = _round_up(max(int(block_b), 1), 8)
    TB = min(TB, _round_up(B, 8))
    if B >= 16:
        # keep >=2 blocks so both v7x TensorCores get work on the parallel axis
        TB = min(TB, _round_up(pl.cdiv(B, 2), 8))
    while TB > 8 and footprint(TB, 8) > usable:
        TB -= 8

    # --- choose patch-chunk length Pc (multiple of 8), VMEM-bounded ---------
    row_cap = max(8, ((2048 // TB) // 8) * 8)    # soft cap on MXU M rows/step
    Pc = max(8, min(P8, row_cap))
    while Pc > 8 and footprint(TB, Pc) > usable:
        Pc -= 8
    # TODO(synk): if even (TB=8, Pc=8) exceeds the budget (enormous C*patch^2),
    #             a D-chunked accumulation would be required; not implemented.

    num_blocks = pl.cdiv(B, TB)
    num_chunks = pl.cdiv(P, Pc)
    B_pad = num_blocks * TB
    P_pad = num_chunks * Pc

    # --- glue: extract non-overlapping patches (channel-major inside patch,
    #     matching a torch Conv2d weight flattened as [F, C*ph*pw]) -----------
    patches = x_nchw.reshape(B, C, Hp, patch, Wp, patch)
    patches = patches.transpose(0, 2, 4, 1, 3, 5).reshape(B, P, D)
    patches = patches.astype(compute_dtype)
    if B_pad != B or P_pad != P:
        patches = jnp.pad(patches, ((0, B_pad - B), (0, P_pad - P), (0, 0)))

    w_embed = w_conv.reshape(F_out, D).T.astype(compute_dtype)          # [D, F]
    if F_pad != F_out:
        w_embed = jnp.pad(w_embed, ((0, 0), (0, F_pad - F_out)))
    # fold the 1/P avg-pool scale into the head weight (pool is linear)
    w_proj_scaled = (w_proj.T.astype(jnp.float32) / float(P)).astype(compute_dtype)
    w_proj_scaled = jnp.pad(w_proj_scaled,
                            ((0, F_pad - F_out), (0, E_pad - E)))       # [Fp, Ep]
    # pre-project the conv bias through the head: mean(emb+b)@Wp = mean(emb)@Wp + b@Wp
    b_out = (b_conv[None, :].astype(jnp.float32)
             @ w_proj.T.astype(compute_dtype).astype(jnp.float32))      # [1, E] f32
    b_out = jnp.pad(b_out, ((0, 0), (0, E_pad - E)))                    # [1, Ep]

    need = footprint(TB, Pc)
    vmem_limit = int(min(vmem_budget, max(need + need // 2, 16 << 20)))

    flops = 2 * B_pad * P_pad * D * F_pad + 2 * B_pad * F_pad * E_pad
    bytes_accessed = (B_pad * P_pad * D * itemsize
                      + (D * F_pad + F_pad * E_pad) * itemsize
                      + E_pad * 4
                      + B_pad * E_pad * 4)

    out = pl.pallas_call(
        functools.partial(_trunk_head_kernel, tb=TB, pc=Pc),
        out_shape=jax.ShapeDtypeStruct((B_pad, E_pad), jnp.float32),
        grid=(num_blocks, num_chunks),
        in_specs=[
            pl.BlockSpec((TB, Pc, D), lambda b, c: (b, c, 0)),
            pl.BlockSpec((D, F_pad), lambda b, c: (0, 0)),
            pl.BlockSpec((F_pad, E_pad), lambda b, c: (0, 0)),
            pl.BlockSpec((1, E_pad), lambda b, c: (0, 0)),
        ],
        out_specs=pl.BlockSpec((TB, E_pad), lambda b, c: (b, 0)),
        scratch_shapes=[pltpu.VMEM((TB, F_pad), jnp.float32)],
        compiler_params=pltpu.CompilerParams(
            dimension_semantics=("parallel", "arbitrary"),
            vmem_limit_bytes=vmem_limit),
        cost_estimate=pl.CostEstimate(
            flops=int(flops),
            transcendentals=0,
            bytes_accessed=int(bytes_accessed)),
    )(patches, w_embed, w_proj_scaled, b_out)

    return out[:B, :E]


def _reference_forward(x_nchw, w_conv, b_conv, w_proj, *, patch,
                       compute_dtype=jnp.float32):
    """Plain-JAX reference of the same synthetic trunk+head (for validation).

    `compute_dtype` emulates the kernel's low-precision MXU inputs (values are
    rounded to compute_dtype, math stays in f32)."""
    B, C, H, W = x_nchw.shape
    F_out = w_conv.shape[0]
    Hp, Wp = H // patch, W // patch
    P = Hp * Wp
    D = C * patch * patch
    patches = x_nchw.reshape(B, C, Hp, patch, Wp, patch)
    patches = patches.transpose(0, 2, 4, 1, 3, 5).reshape(B, P, D)
    pf = patches.astype(compute_dtype).astype(jnp.float32)
    we = w_conv.reshape(F_out, D).astype(compute_dtype).astype(jnp.float32)
    wp = w_proj.astype(compute_dtype).astype(jnp.float32)
    emb = pf @ we.T + b_conv[None, None, :]
    pooled = emb.mean(axis=1)
    return pooled @ wp.T


if __name__ == "__main__":
    # Small shapes consistent with the module's forward:
    #   image x: [B=2, C=4, H=16, W=16]  (NCHW, like torch)
    #   trunk num_features = 32, embed_dim = 32, patch = 4
    B, C, H, W = 2, 4, 16, 16
    PATCH = 4
    NUM_FEATURES = 32
    EMBED_DIM = 32

    key = jax.random.PRNGKey(0)
    kx, kw1, kb1, kw2 = jax.random.split(key, 4)

    x = jax.random.normal(kx, (B, C, H, W), dtype=jnp.float32)
    # trunk patch-embed conv weight [F, C, ph, pw] and bias [F]
    w_conv = 0.05 * jax.random.normal(kw1, (NUM_FEATURES, C, PATCH, PATCH),
                                      dtype=jnp.float32)
    b_conv = 0.01 * jax.random.normal(kb1, (NUM_FEATURES,), dtype=jnp.float32)
    # head projection weight (torch nn.Linear layout: [out_features, in_features])
    w_proj = 0.05 * jax.random.normal(kw2, (EMBED_DIM, NUM_FEATURES),
                                      dtype=jnp.float32)

    # f32 compute path: tight numerical check of the fused trunk+head kernel.
    fwd_f32 = jax.jit(functools.partial(timm_model_forward, patch=PATCH,
                                        compute_dtype=jnp.float32))
    out_f32 = fwd_f32(x, w_conv, b_conv, w_proj)
    jax.block_until_ready(out_f32)
    ref_f32 = _reference_forward(x, w_conv, b_conv, w_proj, patch=PATCH,
                                 compute_dtype=jnp.float32)
    assert out_f32.shape == (B, EMBED_DIM)
    assert jnp.allclose(out_f32, ref_f32, atol=1e-4, rtol=1e-4), \
        "f32 kernel mismatch vs reference"

    # bf16 MXU path (v6e/v7x): looser tolerance vs bf16-cast reference.
    fwd_bf16 = jax.jit(functools.partial(timm_model_forward, patch=PATCH,
                                         compute_dtype=jnp.bfloat16))
    out_bf16 = fwd_bf16(x, w_conv, b_conv, w_proj)
    jax.block_until_ready(out_bf16)
    ref_bf16 = _reference_forward(x, w_conv, b_conv, w_proj, patch=PATCH,
                                  compute_dtype=jnp.bfloat16)
    assert out_bf16.shape == (B, EMBED_DIM)
    assert jnp.allclose(out_bf16, ref_bf16, atol=5e-3, rtol=5e-2), \
        "bf16 kernel mismatch vs reference"

    print("KERNEL_OK")
</pallas_src>

<mosaic_0001>
module attributes {stable_mosaic.version = 11 : i64} {
  func.func @_trunk_head_kernel(%arg0: i32, %arg1: i32, %arg2: memref<8x16x64xf32, #tpu.memory_space<vmem>>, %arg3: memref<64x128xf32, #tpu.memory_space<vmem>>, %arg4: memref<128x128xf32, #tpu.memory_space<vmem>>, %arg5: memref<1x128xf32, #tpu.memory_space<vmem>>, %arg6: memref<8x128xf32, #tpu.memory_space<vmem>>, %arg7: memref<8x128xf32, #tpu.memory_space<vmem>>) attributes {dimension_semantics = [#tpu.dimension_semantics<parallel>, #tpu.dimension_semantics<arbitrary>], iteration_bounds = array<i64: 1, 1>, scalar_prefetch = 0 : i64, scratch_operands = 1 : i64, tpu.core_type = #tpu.core_type<tc>, window_params = [{transform_indices = @transform_0, window_bounds = array<i64: 8, 16, 64>}, {pipeline_mode = #tpu.pipeline_mode<synchronous>, transform_indices = @transform_1, window_bounds = array<i64: 64, 128>}, {pipeline_mode = #tpu.pipeline_mode<synchronous>, transform_indices = @transform_2, window_bounds = array<i64: 128, 128>}, {pipeline_mode = #tpu.pipeline_mode<synchronous>, transform_indices = @transform_3, window_bounds = array<i64: 1, 128>}, {transform_indices = @transform_4, window_bounds = array<i64: 8, 128>}]} {
    %c0_i32 = arith.constant 0 : i32
    %0 = arith.cmpi eq, %arg1, %c0_i32 : i32
    %1 = arith.extui %0 : i1 to i32
    %c0_i32_0 = arith.constant 0 : i32
    %2 = arith.cmpi ne, %1, %c0_i32_0 : i32
    scf.if %2 {
      %cst_12 = arith.constant 0.000000e+00 : f32
      %15 = vector.broadcast %cst_12 : f32 to vector<8x128xf32>
      %c0_13 = arith.constant 0 : index
      %c0_14 = arith.constant 0 : index
      %16 = vector.load %arg7[%c0_13, %c0_14] : memref<8x128xf32, #tpu.memory_space<vmem>>, vector<8x128xf32>
      tpu.vector_store %arg7[%c0_13, %c0_14], %15 {strides = array<i32>} : memref<8x128xf32, #tpu.memory_space<vmem>>, vector<8x128xf32>,
    } else {
    }
    %c0 = arith.constant 0 : index
    %c0_1 = arith.constant 0 : index
    %c0_2 = arith.constant 0 : index
    %3 = vector.load %arg2[%c0, %c0_1, %c0_2] : memref<8x16x64xf32, #tpu.memory_space<vmem>>, vector<8x16x64xf32>
    %4 = vector.shape_cast %3 : vector<8x16x64xf32> to vector<128x64xf32>
    %c0_3 = arith.constant 0 : index
    %c0_4 = arith.constant 0 : index
    %5 = vector.load %arg3[%c0_3, %c0_4] : memref<64x128xf32, #tpu.memory_space<vmem>>, vector<64x128xf32>
    %cst = arith.constant dense<0.000000e+00> : vector<128x128xf32>
    %6 = tpu.matmul %4, %5, %cst {dimension_numbers = #tpu.dot_dimension_numbers<[1], [0], [0], [1], [0, 0, 1, 1], [], []>} : vector<128x64xf32>, vector<64x128xf32>, vector<128x128xf32> -> vector<128x128xf32>
    %c0_5 = arith.constant 0 : index
    %c0_6 = arith.constant 0 : index
    %7 = vector.load %arg7[%c0_5, %c0_6] : memref<8x128xf32, #tpu.memory_space<vmem>>, vector<8x128xf32>
    %8 = vector.shape_cast %6 : vector<128x128xf32> to vector<8x16x128xf32>
    %cst_7 = arith.constant dense<0.000000e+00> : vector<8x128xf32>
    %9 = vector.multi_reduction <add>, %8, %cst_7 [1] : vector<8x16x128xf32> to vector<8x128xf32>
    %10 = arith.addf %7, %9 : vector<8x128xf32>
    %c0_8 = arith.constant 0 : index
    %c0_9 = arith.constant 0 : index
    %11 = vector.load %arg7[%c0_8, %c0_9] : memref<8x128xf32, #tpu.memory_space<vmem>>, vector<8x128xf32>
    tpu.vector_store %arg7[%c0_8, %c0_9], %10 {strides = array<i32>} : memref<8x128xf32, #tpu.memory_space<vmem>>, vector<8x128xf32>,
    %c0_i32_10 = arith.constant 0 : i32
    %12 = arith.cmpi eq, %arg1, %c0_i32_10 : i32
    %13 = arith.extui %12 : i1 to i32
    %c0_i32_11 = arith.constant 0 : i32
    %14 = arith.cmpi ne, %13, %c0_i32_11 : i32
    scf.if %14 {
      %c0_12 = arith.constant 0 : index
      %c0_13 = arith.constant 0 : index
      %15 = vector.load %arg7[%c0_12, %c0_13] : memref<8x128xf32, #tpu.memory_space<vmem>>, vector<8x128xf32>
      %c0_14 = arith.constant 0 : index
      %c0_15 = arith.constant 0 : index
      %16 = vector.load %arg4[%c0_14, %c0_15] : memref<128x128xf32, #tpu.memory_space<vmem>>, vector<128x128xf32>
      %cst_16 = arith.constant dense<0.000000e+00> : vector<8x128xf32>
      %17 = tpu.matmul %15, %16, %cst_16 {dimension_numbers = #tpu.dot_dimension_numbers<[1], [0], [0], [1], [0, 0, 1, 1], [], []>} : vector<8x128xf32>, vector<128x128xf32>, vector<8x128xf32> -> vector<8x128xf32>
      %c0_17 = arith.constant 0 : index
      %c0_18 = arith.constant 0 : index
      %18 = vector.load %arg5[%c0_17, %c0_18] : memref<1x128xf32, #tpu.memory_space<vmem>>, vector<1x128xf32>
      %19 = vector.broadcast %18 : vector<1x128xf32> to vector<8x128xf32>
      %20 = arith.addf %17, %19 : vector<8x128xf32>
      %c0_19 = arith.constant 0 : index
      %c0_20 = arith.constant 0 : index
      %21 = vector.load %arg6[%c0_19, %c0_20] : memref<8x128xf32, #tpu.memory_space<vmem>>, vector<8x128xf32>
      tpu.vector_store %arg6[%c0_19, %c0_20], %20 {strides = array<i32>} : memref<8x128xf32, #tpu.memory_space<vmem>>, vector<8x128xf32>,
    } else {
    }
    return
  }
  func.func @transform_0(%arg0: i32, %arg1: i32) -> (i32, i32, i32) {
    %c0_i32 = arith.constant 0 : i32
    %c0_i32_0 = arith.constant 0 : i32
    return %arg0, %arg1, %c0_i32 : i32, i32, i32
  }
  func.func @transform_1(%arg0: i32, %arg1: i32) -> (i32, i32) {
    %c0_i32 = arith.constant 0 : i32
    %c0_i32_0 = arith.constant 0 : i32
    %c0_i32_1 = arith.constant 0 : i32
    return %c0_i32, %c0_i32_0 : i32, i32
  }
  func.func @transform_2(%arg0: i32, %arg1: i32) -> (i32, i32) {
    %c0_i32 = arith.constant 0 : i32
    %c0_i32_0 = arith.constant 0 : i32
    %c0_i32_1 = arith.constant 0 : i32
    return %c0_i32, %c0_i32_0 : i32, i32
  }
  func.func @transform_3(%arg0: i32, %arg1: i32) -> (i32, i32) {
    %c0_i32 = arith.constant 0 : i32
    %c0_i32_0 = arith.constant 0 : i32
    %c0_i32_1 = arith.constant 0 : i32
    return %c0_i32, %c0_i32_0 : i32, i32
  }
  func.func @transform_4(%arg0: i32, %arg1: i32) -> (i32, i32) {
    %c0_i32 = arith.constant 0 : i32
    %c0_i32_0 = arith.constant 0 : i32
    return %arg0, %c0_i32 : i32, i32
  }
}

</mosaic_0001>

<llo_original>
// kernel: timm_model_forward.1
$region0: #{timm_model_forward.1}
  #allocation0 [shape = 'u32[]', space=smem, size = 0x4, offset = 0x4, fixed_abs, tag = 'smem constant byte address 0x4 - core index']
  #allocation1 [shape = 'u32[72,128]{1,0:T(1,128)}', space=vmem, size = 0x9000, scoped, tag = 'internal scratch']
  #allocation2 [shape = 'f32[8,128]{1,0:T(8,128)}', space=vmem, size = 0x1000, scoped, tag = 'scratch operand']
  %s0 = inlined_call_operand.vmem [shape: f32[8,16,64], index: 0, kind: input, shape index: {}]
  %s1 = inlined_call_operand.vmem [shape: f32[64,128], index: 1, kind: input, shape index: {}]
  %s2 = inlined_call_operand.vmem [shape: f32[128,128], index: 2, kind: input, shape index: {}]
  %s3 = inlined_call_operand.vmem [shape: f32[1,128], index: 3, kind: input, shape index: {}]
  %s4 = inlined_call_operand.vmem [shape: f32[8,128], index: 4, kind: output, shape index: {}]
  %s5 = sld [smem:[#allocation0]]
  $region34: #{timm_model_forward.1} parent=0
    _
  %s7 = ssub.s32 1, %s5
  %s8 = scalar_select 0, %s7, %s5
  // Predicated region
  $region2: #{timm_model_forward.1} parent=0 // pred_check
    _
  $region3: #{timm_model_forward.1} parent=0 // pred_check_branch
    %10 = sbr.rel (0) target = $region5
  $region4: #{timm_model_forward.1} parent=0 // pred_region
    _
  $region5: #{timm_model_forward.1} parent=0 // pred_fallthru
    _
  // Predicated region
  $region6: #{timm_model_forward.1} parent=0 // pred_check
    _
  $region7: #{timm_model_forward.1} parent=0 // pred_check_branch
    %12 = sbr.rel (0) target = $region9
  $region8: #{timm_model_forward.1} parent=0 // pred_region
    _
  $region9: #{timm_model_forward.1} parent=0 // pred_fallthru
    _
  // Predicated region
  $region10: #{timm_model_forward.1} parent=0 // pred_check
    _
  $region11: #{timm_model_forward.1} parent=0 // pred_check_branch
    %14 = sbr.rel (0) target = $region13
  $region12: #{timm_model_forward.1} parent=0 // pred_region
    _
  $region13: #{timm_model_forward.1} parent=0 // pred_fallthru
    _
  // Predicated region
  $region14: #{timm_model_forward.1} parent=0 // pred_check
    _
  $region15: #{timm_model_forward.1} parent=0 // pred_check_branch
    %16 = sbr.rel (0) target = $region17
  $region16: #{timm_model_forward.1} parent=0 // pred_region
    _
  $region17: #{timm_model_forward.1} parent=0 // pred_fallthru
    _
  %p17 = scmp.eq.s32.totalorder 0, 0
  // Predicated region
  $region18: #{timm_model_forward.1} parent=0 // pred_check
    %p18 = pneg %p17
  $region19: #{timm_model_forward.1} parent=0 // pred_check_branch
    %20 = sbr.rel (%p18) target = $region21
  $region20: #{timm_model_forward.1} parent=0 // pred_region
    %21 = vst [vmem:[#allocation2] sm:$0xff] 0.0
  $region21: #{timm_model_forward.1} parent=0 // pred_fallthru
    _
  %v22 = vld [vmem:[%s0] sm:$0xff]
  %v23 = vld [vmem:[%s0 + $0x8] sm:$0xff]
  %v24 = vld [vmem:[%s0 + $0x10] sm:$0xff]
  %v25 = vld [vmem:[%s0 + $0x18] sm:$0xff]
  %v26 = vld [vmem:[%s0 + $0x20] sm:$0xff]
  %v27 = vld [vmem:[%s0 + $0x28] sm:$0xff]
  %v28 = vld [vmem:[%s0 + $0x30] sm:$0xff]
  %v29 = vld [vmem:[%s0 + $0x38] sm:$0xff]
  %v30 = vld [vmem:[%s0 + $0x40] sm:$0xff]
  %v31 = vld [vmem:[%s0 + $0x48] sm:$0xff]
  %v32 = vld [vmem:[%s0 + $0x50] sm:$0xff]
  %v33 = vld [vmem:[%s0 + $0x58] sm:$0xff]
  %v34 = vld [vmem:[%s0 + $0x60] sm:$0xff]
  %v35 = vld [vmem:[%s0 + $0x68] sm:$0xff]
  %v36 = vld [vmem:[%s0 + $0x70] sm:$0xff]
  %v37 = vld [vmem:[%s0 + $0x78] sm:$0xff]
  %v38 = vld [vmem:[%s1] sm:$0xff]
  %v39 = vld [vmem:[%s1 + $0x8] sm:$0xff]
  %v40 = vld [vmem:[%s1 + $0x10] sm:$0xff]
  %v41 = vld [vmem:[%s1 + $0x18] sm:$0xff]
  %v42 = vld [vmem:[%s1 + $0x20] sm:$0xff]
  %v43 = vld [vmem:[%s1 + $0x28] sm:$0xff]
  %v44 = vld [vmem:[%s1 + $0x30] sm:$0xff]
  %v45 = vld [vmem:[%s1 + $0x38] sm:$0xff]
  %vm46 = vcmask 523264
  %v48 = vsel %vm46, %v22, 0
  %v51 = vsel %vm46, %v23, 0
  %v54 = vsel %vm46, %v24, 0
  %v57 = vsel %vm46, %v25, 0
  %v60 = vsel %vm46, %v26, 0
  %v63 = vsel %vm46, %v27, 0
  %v66 = vsel %vm46, %v28, 0
  %v69 = vsel %vm46, %v29, 0
  %v72 = vsel %vm46, %v30, 0
  %v75 = vsel %vm46, %v31, 0
  %v78 = vsel %vm46, %v32, 0
  %v81 = vsel %vm46, %v33, 0
  %v84 = vsel %vm46, %v34, 0
  %v87 = vsel %vm46, %v35, 0
  %v90 = vsel %vm46, %v36, 0
  %v93 = vsel %vm46, %v37, 0
  %95 = vmatpush.msra.mxu0 0.0
  %96 = vmatpush.msra.mxu0 0.0
  %97 = vmatpush.msra.mxu0 0.0
  %98 = vmatpush.msra.mxu0 0.0
  %99 = vmatpush.msra.mxu0 0.0
  %100 = vmatpush.msra.mxu0 0.0
  %101 = vmatpush.msra.mxu0 0.0
  %102 = vmatpush.msra.mxu0 0.0
  %103 = vmatpush.msra.mxu0 %v45
  %104 = vmatpush.msra.mxu0 %v44
  %105 = vmatpush.msra.mxu0 %v43
  %106 = vmatpush.msra.mxu0 %v42
  %107 = vmatpush.msra.mxu0 %v41
  %108 = vmatpush.msra.mxu0 %v40
  %109 = vmatpush.msra.mxu0 %v39
  %110 = vmatpush.msra.mxu0 %v38
  %111 = vmatmul.f32.gmra.mxu0 %v48
  %v112 = vpop.f32.mrf.mxu0
  %v113 = vadd.f32 0.0, %v112
  %114 = vmatmul.f32.gmra.mxu0 %v51
  %v115 = vpop.f32.mrf.mxu0
  %v116 = vadd.f32 0.0, %v115
  %117 = vmatmul.f32.gmra.mxu0 %v54
  %v118 = vpop.f32.mrf.mxu0
  %v119 = vadd.f32 0.0, %v118
  %120 = vmatmul.f32.gmra.mxu0 %v57
  %v121 = vpop.f32.mrf.mxu0
  %v122 = vadd.f32 0.0, %v121
  %123 = vmatmul.f32.gmra.mxu0 %v60
  %v124 = vpop.f32.mrf.mxu0
  %v125 = vadd.f32 0.0, %v124
  %126 = vmatmul.f32.gmra.mxu0 %v63
  %v127 = vpop.f32.mrf.mxu0
  %v128 = vadd.f32 0.0, %v127
  %129 = vmatmul.f32.gmra.mxu0 %v66
  %v130 = vpop.f32.mrf.mxu0
  %v131 = vadd.f32 0.0, %v130
  %132 = vmatmul.f32.gmra.mxu0 %v69
  %v133 = vpop.f32.mrf.mxu0
  %v134 = vadd.f32 0.0, %v133
  %135 = vmatmul.f32.gmra.mxu0 %v72
  %v136 = vpop.f32.mrf.mxu0
  %v137 = vadd.f32 0.0, %v136
  %138 = vmatmul.f32.gmra.mxu0 %v75
  %v139 = vpop.f32.mrf.mxu0
  %v140 = vadd.f32 0.0, %v139
  %141 = vmatmul.f32.gmra.mxu0 %v78
  %v142 = vpop.f32.mrf.mxu0
  %v143 = vadd.f32 0.0, %v142
  %144 = vmatmul.f32.gmra.mxu0 %v81
  %v145 = vpop.f32.mrf.mxu0
  %v146 = vadd.f32 0.0, %v145
  %147 = vmatmul.f32.gmra.mxu0 %v84
  %v148 = vpop.f32.mrf.mxu0
  %v149 = vadd.f32 0.0, %v148
  %150 = vmatmul.f32.gmra.mxu0 %v87
  %v151 = vpop.f32.mrf.mxu0
  %v152 = vadd.f32 0.0, %v151
  %153 = vmatmul.f32.gmra.mxu0 %v90
  %v154 = vpop.f32.mrf.mxu0
  %v155 = vadd.f32 0.0, %v154
  %156 = vmatmul.f32.gmra.mxu0 %v93
  %v157 = vpop.f32.mrf.mxu0
  %v158 = vadd.f32 0.0, %v157
  %159 = vdwg.mxu0
  %v160 = vld [vmem:[#allocation2] sm:$0xff]
  %v161 = vadd.f32 %v113, %v116
  %v162 = vrot.slane %v161, 4
  %v163 = vadd.f32 %v161, %v162
  %v164 = vrot.slane %v163, 2
  %v165 = vadd.f32 %v163, %v164
  %v166 = vrot.slane %v165, 1
  %v167 = vadd.f32 %v165, %v166
  %v168 = vadd.f32 %v119, %v122
  %v169 = vrot.slane %v168, 4
  %v170 = vadd.f32 %v168, %v169
  %v171 = vrot.slane %v170, 2
  %v172 = vadd.f32 %v170, %v171
  %v173 = vrot.slane %v172, 1
  %v174 = vadd.f32 %v172, %v173
  %v175 = vadd.f32 %v125, %v128
  %v176 = vrot.slane %v175, 4
  %v177 = vadd.f32 %v175, %v176
  %v178 = vrot.slane %v177, 2
  %v179 = vadd.f32 %v177, %v178
  %v180 = vrot.slane %v179, 1
  %v181 = vadd.f32 %v179, %v180
  %v182 = vadd.f32 %v131, %v134
  %v183 = vrot.slane %v182, 4
  %v184 = vadd.f32 %v182, %v183
  %v185 = vrot.slane %v184, 2
  %v186 = vadd.f32 %v184, %v185
  %v187 = vrot.slane %v186, 1
  %v188 = vadd.f32 %v186, %v187
  %v189 = vadd.f32 %v137, %v140
  %v190 = vrot.slane %v189, 4
  %v191 = vadd.f32 %v189, %v190
  %v192 = vrot.slane %v191, 2
  %v193 = vadd.f32 %v191, %v192
  %v194 = vrot.slane %v193, 1
  %v195 = vadd.f32 %v193, %v194
  %v196 = vadd.f32 %v143, %v146
  %v197 = vrot.slane %v196, 4
  %v198 = vadd.f32 %v196, %v197
  %v199 = vrot.slane %v198, 2
  %v200 = vadd.f32 %v198, %v199
  %v201 = vrot.slane %v200, 1
  %v202 = vadd.f32 %v200, %v201
  %v203 = vadd.f32 %v149, %v152
  %v204 = vrot.slane %v203, 4
  %v205 = vadd.f32 %v203, %v204
  %v206 = vrot.slane %v205, 2
  %v207 = vadd.f32 %v205, %v206
  %v208 = vrot.slane %v207, 1
  %v209 = vadd.f32 %v207, %v208
  %v210 = vadd.f32 %v155, %v158
  %v211 = vrot.slane %v210, 4
  %v212 = vadd.f32 %v210, %v211
  %v213 = vrot.slane %v212, 2
  %v214 = vadd.f32 %v212, %v213
  %v215 = vrot.slane %v214, 1
  %v216 = vadd.f32 %v214, %v215
  %vm225 = vcmask 1041409
  %v226 = vsel %vm225, %v174, %v167
  %vm227 = vcmask 1042434
  %v228 = vsel %vm227, %v181, %v226
  %vm229 = vcmask 1043459
  %v230 = vsel %vm229, %v188, %v228
  %vm231 = vcmask 1044484
  %v232 = vsel %vm231, %v195, %v230
  %vm233 = vcmask 1045509
  %v234 = vsel %vm233, %v202, %v232
  %vm235 = vcmask 1046534
  %v236 = vsel %vm235, %v209, %v234
  %vm237 = vcmask 1047559
  %v238 = vsel %vm237, %v216, %v236
  %v240 = vadd.f32 %v160, %v238
  %241 = vst [vmem:[#allocation2] sm:$0xff] %v240
  // Predicated region
  $region22: #{timm_model_forward.1} parent=0 // pred_check
    %p242 = pneg %p17
  $region23: #{timm_model_forward.1} parent=0 // pred_check_branch
    %244 = sbr.rel (%p242) target = $region25
  $region24: #{timm_model_forward.1} parent=0 // pred_region
    %v245 = vld [vmem:[#allocation2] sm:$0xff]
    %v246 = vld [vmem:[%s2] sm:$0xff]
    %v247 = vld [vmem:[%s2 + $0x8] sm:$0xff]
    %v248 = vld [vmem:[%s2 + $0x10] sm:$0xff]
    %v249 = vld [vmem:[%s2 + $0x18] sm:$0xff]
    %v250 = vld [vmem:[%s2 + $0x20] sm:$0xff]
    %v251 = vld [vmem:[%s2 + $0x28] sm:$0xff]
    %v252 = vld [vmem:[%s2 + $0x30] sm:$0xff]
    %v253 = vld [vmem:[%s2 + $0x38] sm:$0xff]
    %v254 = vld [vmem:[%s2 + $0x40] sm:$0xff]
    %v255 = vld [vmem:[%s2 + $0x48] sm:$0xff]
    %v256 = vld [vmem:[%s2 + $0x50] sm:$0xff]
    %v257 = vld [vmem:[%s2 + $0x58] sm:$0xff]
    %v258 = vld [vmem:[%s2 + $0x60] sm:$0xff]
    %v259 = vld [vmem:[%s2 + $0x68] sm:$0xff]
    %v260 = vld [vmem:[%s2 + $0x70] sm:$0xff]
    %v261 = vld [vmem:[%s2 + $0x78] sm:$0xff]
    %v262 = vld [vmem:[%s3] sm:$0x1]
    %v264 = vperm.slane %v262, 0
    %266 = vmatpush.msra.mxu0 %v261
    %267 = vmatpush.msra.mxu0 %v260
    %268 = vmatpush.msra.mxu0 %v259
    %269 = vmatpush.msra.mxu0 %v258
    %270 = vmatpush.msra.mxu0 %v257
    %271 = vmatpush.msra.mxu0 %v256
    %272 = vmatpush.msra.mxu0 %v255
    %273 = vmatpush.msra.mxu0 %v254
    %274 = vmatpush.msra.mxu0 %v253
    %275 = vmatpush.msra.mxu0 %v252
    %276 = vmatpush.msra.mxu0 %v251
    %277 = vmatpush.msra.mxu0 %v250
    %278 = vmatpush.msra.mxu0 %v249
    %279 = vmatpush.msra.mxu0 %v248
    %280 = vmatpush.msra.mxu0 %v247
    %281 = vmatpush.msra.mxu0 %v246
    %282 = vmatmul.f32.gmra.mxu0 %v245
    %v283 = vpop.f32.mrf.mxu0
    %v284 = vadd.f32 %v264, %v283
    %285 = vdwg.mxu0
    %286 = vst [vmem:[%s4] sm:$0xff] %v284
  $region25: #{timm_model_forward.1} parent=0 // pred_fallthru
    _
  // Predicated region
  $region26: #{timm_model_forward.1} parent=0 // pred_check
    _
  $region27: #{timm_model_forward.1} parent=0 // pred_check_branch
    %288 = sbr.rel (0) target = $region29
  $region28: #{timm_model_forward.1} parent=0 // pred_region
    _
  $region29: #{timm_model_forward.1} parent=0 // pred_fallthru
    _
  // Predicated region
  $region30: #{timm_model_forward.1} parent=0 // pred_check
    _
  $region31: #{timm_model_forward.1} parent=0 // pred_check_branch
    %290 = sbr.rel (0) target = $region33
  $region32: #{timm_model_forward.1} parent=0 // pred_region
    _
  $region33: #{timm_model_forward.1} parent=0 // pred_fallthru
    _

</llo_original>
